<compile_context>
chip_gen: v5e
topology: v5e:2x2
jax: 0.10.0
libtpu: 0.0.40
codegen_flags: <defaults>
</compile_context>

<pallas_src>
import jax
import jax.numpy as jnp
from jax.experimental import pallas as pl
from jax.experimental.pallas import tpu as pltpu


def _round_up(x, m):
    return (x + m - 1) // m * m


def _aem_kernel(qw_ref, items_ref, mask_ref, wq_ref, bq_ref, wa_ref, ba_ref,
                rmat_ref, out_ref):
    # qw_ref:    (TB, W, E)   gathered query-word embeddings
    # items_ref: (TB, N, E)   gathered user-bought item embeddings
    # mask_ref:  (TB, N)      float mask (lane-dense)
    # wq_ref:    (E, E)       query_projection weight, (in, out)
    # bq_ref:    (1, E)       query_projection bias
    # wa_ref:    (E, H*E)     fused attention query_projection, (in, out)
    # ba_ref:    (1, H*E)     fused attention bias
    # rmat_ref:  (H*E, E)     block matrix folding the head reduce_projection
    # out_ref:   (TB, E)      personalized model output

    # query tower: mean over words -> Linear -> tanh            (TB, E)
    q = jnp.mean(qw_ref[...], axis=1)
    q = jnp.tanh(jnp.dot(q, wq_ref[...],
                         preferred_element_type=jnp.float32) + bq_ref[...])

    # fused multi-head projection: one MXU push                 (TB, H*E)
    pq = jnp.tanh(jnp.dot(q, wa_ref[...],
                          preferred_element_type=jnp.float32) + ba_ref[...])
    # fold reduce_projection over heads: v[b,e] = sum_h r[h]*pq[b, e*H + h]
    v = jnp.dot(pq, rmat_ref[...], preferred_element_type=jnp.float32)  # (TB,E)

    items = items_ref[...]                                      # (TB, N, E)
    # per-item score: contraction over E on VPU/XLU (a matmul here would have
    # a 1-wide MXU output)
    reduced = jnp.sum(items * v[:, None, :], axis=-1)           # (TB, N)
    scores = reduced - jnp.max(reduced, axis=1, keepdims=True)  # (TB, N)
    att = jnp.exp(scores) * mask_ref[...]                       # (TB, N)
    denom = jnp.sum(att, axis=1, keepdims=True)                 # (TB, 1)
    denom = jnp.where(denom < 1e-7, denom + 1.0, denom)
    weight = att * pl.reciprocal(denom, approx=True)            # (TB, N)
    user_emb = jnp.sum(weight[:, :, None] * items, axis=1)      # (TB, E)

    out_ref[...] = (0.5 * (q + user_emb)).astype(out_ref.dtype)


def aem_forward(params, user_bought_items, query_words, user_bought_masks,
                *, max_block_b=256, tile_budget_bytes=8 << 20):
    """AEM.forward(..., mode='test') -> personalized_model of shape (B, E)."""
    word_emb = params["word_embedding"]          # (word_num, E)
    item_emb = params["item_embedding"]          # (item_num, E)
    H = params["head_num"]

    E = word_emb.shape[1]
    B, W = query_words.shape
    N = user_bought_items.shape[1]

    # --- glue: data-dependent embedding gathers stay in plain JAX ---
    qw_emb = word_emb[query_words].astype(jnp.float32)           # (B, W, E)
    items_emb = item_emb[user_bought_items].astype(jnp.float32)  # (B, N, E)
    mask = user_bought_masks.reshape(B, N).astype(jnp.float32)   # (B, N)

    # --- glue: weight layout prep (torch Linear weight is (out, in)) ---
    wq_t = params["query_projection_w"].T.astype(jnp.float32)          # (E, E)
    bq = params["query_projection_b"].reshape(1, E).astype(jnp.float32)
    wa_t = params["attn_query_w"].T.astype(jnp.float32)                # (E, H*E)
    ba = params["attn_query_b"].reshape(1, E * H).astype(jnp.float32)
    r = params["attn_reduce_w"].reshape(H).astype(jnp.float32)         # (H,)
    # torch .view(B, E, H): flat column o = e*H + h.  Fold the (linear) head
    # reduction into a block matrix R[e*H + h, f] = r[h] * delta(e, f).
    rmat = jnp.einsum("h,ef->ehf", r,
                      jnp.eye(E, dtype=jnp.float32)).reshape(E * H, E)

    # --- batch tiling (TB multiple of 8, sized to a conservative VMEM budget
    # so it also fits v7x's smaller VMEM; double-buffered inputs dominate) ---
    per_row_bytes = (W * E + N * E + N + E) * 4
    tb = max(8, (tile_budget_bytes // (2 * per_row_bytes)) // 8 * 8)
    tb = min(tb, max_block_b, _round_up(B, 8))
    tb = max(8, tb // 8 * 8)
    b_pad = _round_up(B, tb)

    pad = b_pad - B
    if pad:
        qw_emb = jnp.pad(qw_emb, ((0, pad), (0, 0), (0, 0)))
        items_emb = jnp.pad(items_emb, ((0, pad), (0, 0), (0, 0)))
        mask = jnp.pad(mask, ((0, pad), (0, 0)))

    out = pl.pallas_call(
        _aem_kernel,
        out_shape=jax.ShapeDtypeStruct((b_pad, E), jnp.float32),
        grid_spec=pltpu.PrefetchScalarGridSpec(
            num_scalar_prefetch=0,
            grid=(b_pad // tb,),
            in_specs=[
                pl.BlockSpec((tb, W, E), lambda b: (b, 0, 0)),
                pl.BlockSpec((tb, N, E), lambda b: (b, 0, 0)),
                pl.BlockSpec((tb, N), lambda b: (b, 0)),
                pl.BlockSpec((E, E), lambda b: (0, 0)),
                pl.BlockSpec((1, E), lambda b: (0, 0)),
                pl.BlockSpec((E, E * H), lambda b: (0, 0)),
                pl.BlockSpec((1, E * H), lambda b: (0, 0)),
                pl.BlockSpec((E * H, E), lambda b: (0, 0)),
            ],
            out_specs=pl.BlockSpec((tb, E), lambda b: (b, 0)),
        ),
        compiler_params=pltpu.CompilerParams(
            dimension_semantics=("parallel",)),
    )(qw_emb, items_emb, mask, wq_t, bq, wa_t, ba, rmat)
    return out[:B]                                               # (B, E)


def aem_reference(params, user_bought_items, query_words, user_bought_masks):
    """Pure-JAX reference matching the PyTorch forward exactly."""
    word_emb = params["word_embedding"]
    item_emb = params["item_embedding"]
    H = params["head_num"]

    qw_emb = word_emb[query_words]               # (B, W, E)
    items_emb = item_emb[user_bought_items]      # (B, N, E)
    B, _, E = qw_emb.shape
    N = items_emb.shape[1]
    mask = user_bought_masks.reshape(B, N, 1).astype(jnp.float32)

    q = jnp.mean(qw_emb, axis=1)                                    # (B, E)
    q = jnp.tanh(q @ params["query_projection_w"].T
                 + params["query_projection_b"])                    # (B, E)

    pq = jnp.tanh(q @ params["attn_query_w"].T
                  + params["attn_query_b"])                         # (B, E*H)
    pq = pq.reshape(B, E, H)
    dotted = jnp.einsum("bne,beh->bnh", items_emb, pq)              # (B, N, H)
    reduced = jnp.einsum("bnh,h->bn",
                         dotted, params["attn_reduce_w"][0])[..., None]
    scores = reduced - jnp.max(reduced, axis=1, keepdims=True)
    att = jnp.exp(scores) * mask
    denom = jnp.sum(att, axis=1, keepdims=True)
    denom = jnp.where(denom < 1e-7, denom + 1.0, denom)
    weight = att / denom
    user_emb = jnp.sum(weight * items_emb, axis=1)                  # (B, E)
    return 0.5 * (q + user_emb)


if __name__ == "__main__":
    B, N, W, E, H = 2, 8, 8, 32, 4
    word_num, item_num = 50, 40

    key = jax.random.PRNGKey(0)
    ks = jax.random.split(key, 12)

    # Deterministic synthetic parameters (shapes per AEM.__init__).
    # NOTE: torch init zeros the item table / biases; random values are used
    # here so the kernel's compute path is actually exercised.
    word_embedding = jax.random.uniform(
        ks[0], (word_num, E), jnp.float32, -0.5 / E, 0.5 / E).at[0].set(0.0)
    item_embedding = (0.1 * jax.random.normal(
        ks[1], (item_num, E), jnp.float32)).at[0].set(0.0)
    query_projection_w = 0.2 * jax.random.normal(ks[2], (E, E), jnp.float32)
    query_projection_b = 0.1 * jax.random.normal(ks[3], (E,), jnp.float32)
    attn_query_w = 0.2 * jax.random.normal(ks[4], (E * H, E), jnp.float32)
    attn_query_b = 0.1 * jax.random.normal(ks[5], (E * H,), jnp.float32)
    attn_reduce_w = 0.5 * jax.random.normal(ks[6], (1, H), jnp.float32)

    params = dict(
        word_embedding=word_embedding,
        item_embedding=item_embedding,
        query_projection_w=query_projection_w,
        query_projection_b=query_projection_b,
        attn_query_w=attn_query_w,
        attn_query_b=attn_query_b,
        attn_reduce_w=attn_reduce_w,
        head_num=H,
    )

    # Inputs (mode='test'). mask is (B, N, 1) — the 3-D form the module's
    # broadcasting actually requires; the wrapper flattens it to (B, N).
    user_bought_items = jax.random.randint(ks[7], (B, N), 0, item_num)
    query_words = jax.random.randint(ks[8], (B, W), 1, word_num)
    user_bought_masks = (
        jax.random.uniform(ks[9], (B, N, 1)) > 0.3).astype(jnp.float32)

    out = aem_forward(params, user_bought_items, query_words, user_bought_masks)
    out = jax.block_until_ready(out)

    ref = aem_reference(params, user_bought_items, query_words,
                        user_bought_masks)
    assert out.shape == (B, E)
    assert jnp.allclose(out, ref, atol=2e-4, rtol=2e-4), (
        f"mismatch: max abs err {jnp.max(jnp.abs(out - ref))}")
    print("KERNEL_OK")
</pallas_src>

<mosaic_0001>
module attributes {stable_mosaic.version = 11 : i64} {
  func.func @_aem_kernel(%arg0: i32, %arg1: memref<8x8x32xf32, #tpu.memory_space<vmem>>, %arg2: memref<8x8x32xf32, #tpu.memory_space<vmem>>, %arg3: memref<8x8xf32, #tpu.memory_space<vmem>>, %arg4: memref<32x32xf32, #tpu.memory_space<vmem>>, %arg5: memref<1x32xf32, #tpu.memory_space<vmem>>, %arg6: memref<32x128xf32, #tpu.memory_space<vmem>>, %arg7: memref<1x128xf32, #tpu.memory_space<vmem>>, %arg8: memref<128x32xf32, #tpu.memory_space<vmem>>, %arg9: memref<8x32xf32, #tpu.memory_space<vmem>>) attributes {dimension_semantics = [#tpu.dimension_semantics<parallel>], iteration_bounds = array<i64: 1>, scalar_prefetch = 0 : i64, scratch_operands = 0 : i64, tpu.core_type = #tpu.core_type<tc>, window_params = [{transform_indices = @transform_0, window_bounds = array<i64: 8, 8, 32>}, {transform_indices = @transform_1, window_bounds = array<i64: 8, 8, 32>}, {transform_indices = @transform_2, window_bounds = array<i64: 8, 8>}, {pipeline_mode = #tpu.pipeline_mode<synchronous>, transform_indices = @transform_3, window_bounds = array<i64: 32, 32>}, {pipeline_mode = #tpu.pipeline_mode<synchronous>, transform_indices = @transform_4, window_bounds = array<i64: 1, 32>}, {pipeline_mode = #tpu.pipeline_mode<synchronous>, transform_indices = @transform_5, window_bounds = array<i64: 32, 128>}, {pipeline_mode = #tpu.pipeline_mode<synchronous>, transform_indices = @transform_6, window_bounds = array<i64: 1, 128>}, {pipeline_mode = #tpu.pipeline_mode<synchronous>, transform_indices = @transform_7, window_bounds = array<i64: 128, 32>}, {transform_indices = @transform_8, window_bounds = array<i64: 8, 32>}]} {
    %c0 = arith.constant 0 : index
    %c0_0 = arith.constant 0 : index
    %c0_1 = arith.constant 0 : index
    %0 = vector.load %arg1[%c0, %c0_0, %c0_1] : memref<8x8x32xf32, #tpu.memory_space<vmem>>, vector<8x8x32xf32>
    %cst = arith.constant dense<0.000000e+00> : vector<8x32xf32>
    %1 = vector.multi_reduction <add>, %0, %cst [1] : vector<8x8x32xf32> to vector<8x32xf32>
    %cst_2 = arith.constant 8.000000e+00 : f32
    %2 = vector.broadcast %cst_2 : f32 to vector<8x32xf32>
    %3 = arith.divf %1, %2 : vector<8x32xf32>
    %c0_3 = arith.constant 0 : index
    %c0_4 = arith.constant 0 : index
    %4 = vector.load %arg4[%c0_3, %c0_4] : memref<32x32xf32, #tpu.memory_space<vmem>>, vector<32x32xf32>
    %cst_5 = arith.constant dense<0.000000e+00> : vector<8x32xf32>
    %5 = tpu.matmul %3, %4, %cst_5 {dimension_numbers = #tpu.dot_dimension_numbers<[1], [0], [0], [1], [0, 0, 1, 1], [], []>} : vector<8x32xf32>, vector<32x32xf32>, vector<8x32xf32> -> vector<8x32xf32>
    %c0_6 = arith.constant 0 : index
    %c0_7 = arith.constant 0 : index
    %6 = vector.load %arg5[%c0_6, %c0_7] : memref<1x32xf32, #tpu.memory_space<vmem>>, vector<1x32xf32>
    %7 = vector.broadcast %6 : vector<1x32xf32> to vector<8x32xf32>
    %8 = arith.addf %5, %7 : vector<8x32xf32>
    %9 = math.tanh %8 : vector<8x32xf32>
    %c0_8 = arith.constant 0 : index
    %c0_9 = arith.constant 0 : index
    %10 = vector.load %arg6[%c0_8, %c0_9] : memref<32x128xf32, #tpu.memory_space<vmem>>, vector<32x128xf32>
    %cst_10 = arith.constant dense<0.000000e+00> : vector<8x128xf32>
    %11 = tpu.matmul %9, %10, %cst_10 {dimension_numbers = #tpu.dot_dimension_numbers<[1], [0], [0], [1], [0, 0, 1, 1], [], []>} : vector<8x32xf32>, vector<32x128xf32>, vector<8x128xf32> -> vector<8x128xf32>
    %c0_11 = arith.constant 0 : index
    %c0_12 = arith.constant 0 : index
    %12 = vector.load %arg7[%c0_11, %c0_12] : memref<1x128xf32, #tpu.memory_space<vmem>>, vector<1x128xf32>
    %13 = vector.broadcast %12 : vector<1x128xf32> to vector<8x128xf32>
    %14 = arith.addf %11, %13 : vector<8x128xf32>
    %15 = math.tanh %14 : vector<8x128xf32>
    %c0_13 = arith.constant 0 : index
    %c0_14 = arith.constant 0 : index
    %16 = vector.load %arg8[%c0_13, %c0_14] : memref<128x32xf32, #tpu.memory_space<vmem>>, vector<128x32xf32>
    %cst_15 = arith.constant dense<0.000000e+00> : vector<8x32xf32>
    %17 = tpu.matmul %15, %16, %cst_15 {dimension_numbers = #tpu.dot_dimension_numbers<[1], [0], [0], [1], [0, 0, 1, 1], [], []>} : vector<8x128xf32>, vector<128x32xf32>, vector<8x32xf32> -> vector<8x32xf32>
    %c0_16 = arith.constant 0 : index
    %c0_17 = arith.constant 0 : index
    %c0_18 = arith.constant 0 : index
    %18 = vector.load %arg2[%c0_16, %c0_17, %c0_18] : memref<8x8x32xf32, #tpu.memory_space<vmem>>, vector<8x8x32xf32>
    %19 = vector.shape_cast %17 : vector<8x32xf32> to vector<8x1x32xf32>
    %20 = vector.broadcast %19 : vector<8x1x32xf32> to vector<8x8x32xf32>
    %21 = arith.mulf %18, %20 : vector<8x8x32xf32>
    %cst_19 = arith.constant dense<0.000000e+00> : vector<8x8xf32>
    %22 = vector.multi_reduction <add>, %21, %cst_19 [2] : vector<8x8x32xf32> to vector<8x8xf32>
    %cst_20 = arith.constant dense<0xFF800000> : vector<8xf32>
    %23 = vector.multi_reduction <maximumf>, %22, %cst_20 [1] : vector<8x8xf32> to vector<8xf32>
    %24 = vector.shape_cast %23 : vector<8xf32> to vector<8x1xf32>
    %25 = vector.broadcast %24 : vector<8x1xf32> to vector<8x8xf32>
    %26 = arith.subf %22, %25 : vector<8x8xf32>
    %27 = math.exp %26 : vector<8x8xf32>
    %c0_21 = arith.constant 0 : index
    %c0_22 = arith.constant 0 : index
    %28 = vector.load %arg3[%c0_21, %c0_22] : memref<8x8xf32, #tpu.memory_space<vmem>>, vector<8x8xf32>
    %29 = arith.mulf %27, %28 : vector<8x8xf32>
    %cst_23 = arith.constant dense<0.000000e+00> : vector<8xf32>
    %30 = vector.multi_reduction <add>, %29, %cst_23 [1] : vector<8x8xf32> to vector<8xf32>
    %31 = vector.shape_cast %30 : vector<8xf32> to vector<8x1xf32>
    %cst_24 = arith.constant 1.000000e-07 : f32
    %32 = vector.broadcast %cst_24 : f32 to vector<8x1xf32>
    %33 = arith.cmpf olt, %31, %32 : vector<8x1xf32>
    %cst_25 = arith.constant 1.000000e+00 : f32
    %34 = vector.broadcast %cst_25 : f32 to vector<8x1xf32>
    %35 = arith.addf %31, %34 : vector<8x1xf32>
    %36 = arith.select %33, %35, %31 : vector<8x1xi1>, vector<8x1xf32>
    %37 = tpu.reciprocal %36 {approx = true} : vector<8x1xf32> -> vector<8x1xf32>
    %38 = vector.broadcast %37 : vector<8x1xf32> to vector<8x8xf32>
    %39 = arith.mulf %29, %38 : vector<8x8xf32>
    %40 = vector.shape_cast %39 : vector<8x8xf32> to vector<8x8x1xf32>
    %41 = vector.broadcast %40 : vector<8x8x1xf32> to vector<8x8x32xf32>
    %42 = arith.mulf %41, %18 : vector<8x8x32xf32>
    %cst_26 = arith.constant dense<0.000000e+00> : vector<8x32xf32>
    %43 = vector.multi_reduction <add>, %42, %cst_26 [1] : vector<8x8x32xf32> to vector<8x32xf32>
    %44 = arith.addf %9, %43 : vector<8x32xf32>
    %cst_27 = arith.constant 5.000000e-01 : f32
    %45 = vector.broadcast %cst_27 : f32 to vector<8x32xf32>
    %46 = arith.mulf %45, %44 : vector<8x32xf32>
    %c0_28 = arith.constant 0 : index
    %c0_29 = arith.constant 0 : index
    %47 = vector.load %arg9[%c0_28, %c0_29] : memref<8x32xf32, #tpu.memory_space<vmem>>, vector<8x32xf32>
    tpu.vector_store %arg9[%c0_28, %c0_29], %46 {strides = array<i32>} : memref<8x32xf32, #tpu.memory_space<vmem>>, vector<8x32xf32>,
    return
  }
  func.func @transform_0(%arg0: i32) -> (i32, i32, i32) {
    %c0_i32 = arith.constant 0 : i32
    %c0_i32_0 = arith.constant 0 : i32
    %c0_i32_1 = arith.constant 0 : i32
    return %arg0, %c0_i32, %c0_i32_0 : i32, i32, i32
  }
  func.func @transform_1(%arg0: i32) -> (i32, i32, i32) {
    %c0_i32 = arith.constant 0 : i32
    %c0_i32_0 = arith.constant 0 : i32
    %c0_i32_1 = arith.constant 0 : i32
    return %arg0, %c0_i32, %c0_i32_0 : i32, i32, i32
  }
  func.func @transform_2(%arg0: i32) -> (i32, i32) {
    %c0_i32 = arith.constant 0 : i32
    %c0_i32_0 = arith.constant 0 : i32
    return %arg0, %c0_i32 : i32, i32
  }
  func.func @transform_3(%arg0: i32) -> (i32, i32) {
    %c0_i32 = arith.constant 0 : i32
    %c0_i32_0 = arith.constant 0 : i32
    %c0_i32_1 = arith.constant 0 : i32
    return %c0_i32, %c0_i32_0 : i32, i32
  }
  func.func @transform_4(%arg0: i32) -> (i32, i32) {
    %c0_i32 = arith.constant 0 : i32
    %c0_i32_0 = arith.constant 0 : i32
    %c0_i32_1 = arith.constant 0 : i32
    return %c0_i32, %c0_i32_0 : i32, i32
  }
  func.func @transform_5(%arg0: i32) -> (i32, i32) {
    %c0_i32 = arith.constant 0 : i32
    %c0_i32_0 = arith.constant 0 : i32
    %c0_i32_1 = arith.constant 0 : i32
    return %c0_i32, %c0_i32_0 : i32, i32
  }
  func.func @transform_6(%arg0: i32) -> (i32, i32) {
    %c0_i32 = arith.constant 0 : i32
    %c0_i32_0 = arith.constant 0 : i32
    %c0_i32_1 = arith.constant 0 : i32
    return %c0_i32, %c0_i32_0 : i32, i32
  }
  func.func @transform_7(%arg0: i32) -> (i32, i32) {
    %c0_i32 = arith.constant 0 : i32
    %c0_i32_0 = arith.constant 0 : i32
    %c0_i32_1 = arith.constant 0 : i32
    return %c0_i32, %c0_i32_0 : i32, i32
  }
  func.func @transform_8(%arg0: i32) -> (i32, i32) {
    %c0_i32 = arith.constant 0 : i32
    %c0_i32_0 = arith.constant 0 : i32
    return %arg0, %c0_i32 : i32, i32
  }
}

</mosaic_0001>

<llo_original>
// kernel: tpu_custom_call.1
$region0: #{tpu_custom_call.1}
  #allocation0 [shape = 'u32[]', space=smem, size = 0x4, offset = 0x4, fixed_abs, tag = 'smem constant byte address 0x4 - core index']
  #allocation1 [shape = 'u32[72,128]{1,0:T(1,128)}', space=vmem, size = 0x9000, scoped, tag = 'internal scratch']
  %s0 = inlined_call_operand.vmem [shape: f32[8,8,32], index: 0, kind: input, shape index: {}]
  %s1 = inlined_call_operand.vmem [shape: f32[8,8,32], index: 1, kind: input, shape index: {}]
  %s2 = inlined_call_operand.hbm [shape: f32[8,8], index: 2, kind: input, shape index: {}]
  %s3 = inlined_call_operand.vmem [shape: f32[32,32], index: 3, kind: input, shape index: {}]
  %s4 = inlined_call_operand.vmem [shape: f32[1,32], index: 4, kind: input, shape index: {}]
  %s5 = inlined_call_operand.hbm [shape: f32[32,128], index: 5, kind: input, shape index: {}]
  %s6 = inlined_call_operand.vmem [shape: f32[1,128], index: 6, kind: input, shape index: {}]
  %s7 = inlined_call_operand.vmem [shape: f32[128,32], index: 7, kind: input, shape index: {}]
  %s8 = inlined_call_operand.hbm [shape: f32[8,32], index: 8, kind: output, shape index: {}]
  %s9 = sld [smem:[#allocation0]]
  $region50: #{tpu_custom_call.1} parent=0
    _
  %s11 = ssub.s32 1, %s9
  %s12 = scalar_select 0, %s11, %s9
  $region1: #{tpu_custom_call.1} parent=0
    #allocation2 [shape = 'u8[4096]{0}', space=vmem, size = 0x1000, scoped, tag = 'input window, operand 2, single buffered']
    #allocation3 [shape = 's32[1]{0}', space=sflag, size = 0x4, scoped, tag = 'scoped memory for tpu_custom_call.1']
    #allocation4 [shape = 's32[1]{0}', space=sflag, size = 0x4, scoped, tag = 'scoped memory for tpu_custom_call.1']
    #allocation5 [shape = 'u8[16384]{0}', space=vmem, size = 0x4000, scoped, tag = 'input window, operand 5, single buffered']
    #allocation6 [shape = 's32[1]{0}', space=sflag, size = 0x4, scoped, tag = 'scoped memory for tpu_custom_call.1']
    #allocation7 [shape = 'u8[4096]{0}', space=vmem, size = 0x1000, scoped, tag = 'output window, operand 0, single buffered']
    %13 = vsyncpa [#allocation3], 0
    %14 = vsyncpa [#allocation6], 0
    %15 = vsyncpa [#allocation4], 0
    // Predicated region
    $region2: #{tpu_custom_call.1} parent=1 // pred_check
      _
    $region3: #{tpu_custom_call.1} parent=1 // pred_check_branch
      %17 = sbr.rel (0) target = $region5
    $region4: #{tpu_custom_call.1} parent=1 // pred_region
      _
    $region5: #{tpu_custom_call.1} parent=1 // pred_fallthru
      _
    // Predicated region
    $region6: #{tpu_custom_call.1} parent=1 // pred_check
      _
    $region7: #{tpu_custom_call.1} parent=1 // pred_check_branch
      %19 = sbr.rel (0) target = $region9
    $region8: #{tpu_custom_call.1} parent=1 // pred_region
      _
    $region9: #{tpu_custom_call.1} parent=1 // pred_fallthru
      _
    // Predicated region
    $region10: #{tpu_custom_call.1} parent=1 // pred_check
      _
    $region11: #{tpu_custom_call.1} parent=1 // pred_check_branch
      %21 = sbr.rel (0) target = $region13
    $region12: #{tpu_custom_call.1} parent=1 // pred_region
      %23 = vsyncadd [#allocation3], 0
      %s25 = sshll.u32 %s2, 4
      %s26 = int_to_ptr.hbm [resolvable:$true] %s25
      %s27 = sshll.u32 [#allocation2], 4
      %s28 = int_to_ptr.vmem [resolvable:$true] %s27
      %30 = dma.hbm_to_vmem [thread:$0]  %s26, 128, %s28, [#allocation3]
    $region13: #{tpu_custom_call.1} parent=1 // pred_fallthru
      _
    // Predicated region
    $region14: #{tpu_custom_call.1} parent=1 // pred_check
      _
    $region15: #{tpu_custom_call.1} parent=1 // pred_check_branch
      %32 = sbr.rel (0) target = $region17
    $region16: #{tpu_custom_call.1} parent=1 // pred_region
      _
    $region17: #{tpu_custom_call.1} parent=1 // pred_fallthru
      _
    // Predicated region
    $region18: #{tpu_custom_call.1} parent=1 // pred_check
      _
    $region19: #{tpu_custom_call.1} parent=1 // pred_check_branch
      %34 = sbr.rel (0) target = $region21
    $region20: #{tpu_custom_call.1} parent=1 // pred_region
      _
    $region21: #{tpu_custom_call.1} parent=1 // pred_fallthru
      _
    // Predicated region
    $region22: #{tpu_custom_call.1} parent=1 // pred_check
      _
    $region23: #{tpu_custom_call.1} parent=1 // pred_check_branch
      %36 = sbr.rel (0) target = $region25
    $region24: #{tpu_custom_call.1} parent=1 // pred_region
      %38 = vsyncadd [#allocation6], 0
      %s39 = sshll.u32 %s5, 4
      %s40 = int_to_ptr.hbm [resolvable:$true] %s39
      %s41 = sshll.u32 [#allocation5], 4
      %s42 = int_to_ptr.vmem [resolvable:$true] %s41
      %47 = dma.hbm_to_vmem [thread:$0]  %s40, 512, %s42, [#allocation6], 128, 128, 8
    $region25: #{tpu_custom_call.1} parent=1 // pred_fallthru
      _
    // Predicated region
    $region26: #{tpu_custom_call.1} parent=1 // pred_check
      _
    $region27: #{tpu_custom_call.1} parent=1 // pred_check_branch
      %49 = sbr.rel (0) target = $region29
    $region28: #{tpu_custom_call.1} parent=1 // pred_region
      _
    $region29: #{tpu_custom_call.1} parent=1 // pred_fallthru
      _
    // Predicated region
    $region30: #{tpu_custom_call.1} parent=1 // pred_check
      _
    $region31: #{tpu_custom_call.1} parent=1 // pred_check_branch
      %51 = sbr.rel (0) target = $region33
    $region32: #{tpu_custom_call.1} parent=1 // pred_region
      _
    $region33: #{tpu_custom_call.1} parent=1 // pred_fallthru
      _
    // Predicated region
    $region34: #{tpu_custom_call.1} parent=1 // pred_check
      _
    $region35: #{tpu_custom_call.1} parent=1 // pred_check_branch
      %53 = sbr.rel (0) target = $region37
    $region36: #{tpu_custom_call.1} parent=1 // pred_region
      %55 = dma.done [#allocation3], 128
    $region37: #{tpu_custom_call.1} parent=1 // pred_fallthru
      _
    // Predicated region
    $region38: #{tpu_custom_call.1} parent=1 // pred_check
      _
    $region39: #{tpu_custom_call.1} parent=1 // pred_check_branch
      %57 = sbr.rel (0) target = $region41
    $region40: #{tpu_custom_call.1} parent=1 // pred_region
      %59 = dma.done [#allocation6], 512
    $region41: #{tpu_custom_call.1} parent=1 // pred_fallthru
      _
    %v60 = vld [vmem:[%s0] sm:$0xff]
    %v61 = vld [vmem:[%s0 + $0x8] sm:$0xff]
    %v62 = vld [vmem:[%s0 + $0x10] sm:$0xff]
    %v63 = vld [vmem:[%s0 + $0x18] sm:$0xff]
    %v64 = vld [vmem:[%s0 + $0x20] sm:$0xff]
    %v65 = vld [vmem:[%s0 + $0x28] sm:$0xff]
    %v66 = vld [vmem:[%s0 + $0x30] sm:$0xff]
    %v67 = vld [vmem:[%s0 + $0x38] sm:$0xff]
    %vm68 = vcmask 261120
    %v69 = vsel %vm68, %v60, 0.0
    %v70 = vrot.slane %v69, 4
    %v71 = vadd.f32 %v69, %v70
    %v72 = vrot.slane %v71, 2
    %v73 = vadd.f32 %v71, %v72
    %v74 = vrot.slane %v73, 1
    %v75 = vadd.f32 %v73, %v74
    %v76 = vsel %vm68, %v61, 0.0
    %v77 = vrot.slane %v76, 4
    %v78 = vadd.f32 %v76, %v77
    %v79 = vrot.slane %v78, 2
    %v80 = vadd.f32 %v78, %v79
    %v81 = vrot.slane %v80, 1
    %v82 = vadd.f32 %v80, %v81
    %v83 = vsel %vm68, %v62, 0.0
    %v84 = vrot.slane %v83, 4
    %v85 = vadd.f32 %v83, %v84
    %v86 = vrot.slane %v85, 2
    %v87 = vadd.f32 %v85, %v86
    %v88 = vrot.slane %v87, 1
    %v89 = vadd.f32 %v87, %v88
    %v90 = vsel %vm68, %v63, 0.0
    %v91 = vrot.slane %v90, 4
    %v92 = vadd.f32 %v90, %v91
    %v93 = vrot.slane %v92, 2
    %v94 = vadd.f32 %v92, %v93
    %v95 = vrot.slane %v94, 1
    %v96 = vadd.f32 %v94, %v95
    %v97 = vsel %vm68, %v64, 0.0
    %v98 = vrot.slane %v97, 4
    %v99 = vadd.f32 %v97, %v98
    %v100 = vrot.slane %v99, 2
    %v101 = vadd.f32 %v99, %v100
    %v102 = vrot.slane %v101, 1
    %v103 = vadd.f32 %v101, %v102
    %v104 = vsel %vm68, %v65, 0.0
    %v105 = vrot.slane %v104, 4
    %v106 = vadd.f32 %v104, %v105
    %v107 = vrot.slane %v106, 2
    %v108 = vadd.f32 %v106, %v107
    %v109 = vrot.slane %v108, 1
    %v110 = vadd.f32 %v108, %v109
    %v111 = vsel %vm68, %v66, 0.0
    %v112 = vrot.slane %v111, 4
    %v113 = vadd.f32 %v111, %v112
    %v114 = vrot.slane %v113, 2
    %v115 = vadd.f32 %v113, %v114
    %v116 = vrot.slane %v115, 1
    %v117 = vadd.f32 %v115, %v116
    %v118 = vsel %vm68, %v67, 0.0
    %v119 = vrot.slane %v118, 4
    %v120 = vadd.f32 %v118, %v119
    %v121 = vrot.slane %v120, 2
    %v122 = vadd.f32 %v120, %v121
    %v123 = vrot.slane %v122, 1
    %v124 = vadd.f32 %v122, %v123
    %v125 = vrcp.pop 8.0
    %v126 = vmul.f32 8.0, %v125
    %v127 = vsub.f32 1.0, %v126
    %v128 = vmul.f32 %v125, %v127
    %v129 = vadd.f32 %v125, %v128
    %vm130 = vweird.f32 %v125
    %v131 = vsel %vm130, %v125, %v129
    %v132 = vmul.f32 %v75, %v131
    %v133 = vmul.f32 %v82, %v131
    %v134 = vmul.f32 %v89, %v131
    %v135 = vmul.f32 %v96, %v131
    %v136 = vmul.f32 %v103, %v131
    %v137 = vmul.f32 %v110, %v131
    %v138 = vmul.f32 %v117, %v131
    %v139 = vmul.f32 %v124, %v131
    %v140 = vld [vmem:[%s3] sm:$0xff]
    %v141 = vld [vmem:[%s3 + $0x8] sm:$0xff]
    %v142 = vld [vmem:[%s3 + $0x10] sm:$0xff]
    %v143 = vld [vmem:[%s3 + $0x18] sm:$0xff]
    %v144 = vld [vmem:[%s4] sm:$0x1]
    %v146 = vperm.slane %v144, 0
    %vm156 = vcmask 1041409
    %v157 = vsel %vm156, %v133, %v132
    %vm158 = vcmask 1042434
    %v159 = vsel %vm158, %v134, %v157
    %vm160 = vcmask 1043459
    %v161 = vsel %vm160, %v135, %v159
    %vm162 = vcmask 1044484
    %v163 = vsel %vm162, %v136, %v161
    %vm164 = vcmask 1045509
    %v165 = vsel %vm164, %v137, %v163
    %vm166 = vcmask 1046534
    %v167 = vsel %vm166, %v138, %v165
    %vm168 = vcmask 1047559
    %v169 = vsel %vm168, %v139, %v167
    %v170 = vsel %vm68, %v169, 0
    %172 = vmatpush.msra.mxu0 0.0
    %173 = vmatpush.msra.mxu0 0.0
    %174 = vmatpush.msra.mxu0 0.0
    %175 = vmatpush.msra.mxu0 0.0
    %176 = vmatpush.msra.mxu0 0.0
    %177 = vmatpush.msra.mxu0 0.0
    %178 = vmatpush.msra.mxu0 0.0
    %179 = vmatpush.msra.mxu0 0.0
    %180 = vmatpush.msra.mxu0 0.0
    %181 = vmatpush.msra.mxu0 0.0
    %182 = vmatpush.msra.mxu0 0.0
    %183 = vmatpush.msra.mxu0 0.0
    %184 = vmatpush.msra.mxu0 %v143
    %185 = vmatpush.msra.mxu0 %v142
    %186 = vmatpush.msra.mxu0 %v141
    %187 = vmatpush.msra.mxu0 %v140
    %188 = vmatmul.f32.gmra.mxu0 %v170
    %v189 = vpop.f32.mrf.mxu0
    %v190 = vadd.f32 %v146, %v189
    %191 = vdwg.mxu0
    %v192 = vtanh.pop %v190
    %v193 = vld [vmem:[#allocation5] sm:$0xff]
    %v194 = vld [vmem:[#allocation5 + $0x8] sm:$0xff]
    %v195 = vld [vmem:[#allocation5 + $0x10] sm:$0xff]
    %v196 = vld [vmem:[#allocation5 + $0x18] sm:$0xff]
    %v197 = vld [vmem:[%s6] sm:$0x1]
    %v199 = vperm.slane %v197, 0
    %v202 = vsel %vm68, %v192, 0
    %204 = vmatpush.msra.mxu0 0.0
    %205 = vmatpush.msra.mxu0 0.0
    %206 = vmatpush.msra.mxu0 0.0
    %207 = vmatpush.msra.mxu0 0.0
    %208 = vmatpush.msra.mxu0 0.0
    %209 = vmatpush.msra.mxu0 0.0
    %210 = vmatpush.msra.mxu0 0.0
    %211 = vmatpush.msra.mxu0 0.0
    %212 = vmatpush.msra.mxu0 0.0
    %213 = vmatpush.msra.mxu0 0.0
    %214 = vmatpush.msra.mxu0 0.0
    %215 = vmatpush.msra.mxu0 0.0
    %216 = vmatpush.msra.mxu0 %v196
    %217 = vmatpush.msra.mxu0 %v195
    %218 = vmatpush.msra.mxu0 %v194
    %219 = vmatpush.msra.mxu0 %v193
    %220 = vmatmul.f32.gmra.mxu0 %v202
    %v221 = vpop.f32.mrf.mxu0
    %v222 = vadd.f32 %v199, %v221
    %223 = vdwg.mxu0
    %v224 = vtanh.pop %v222
    %v225 = vld [vmem:[%s7] sm:$0xff]
    %v226 = vld [vmem:[%s7 + $0x8] sm:$0xff]
    %v227 = vld [vmem:[%s7 + $0x10] sm:$0xff]
    %v228 = vld [vmem:[%s7 + $0x18] sm:$0xff]
    %v229 = vld [vmem:[%s7 + $0x20] sm:$0xff]
    %v230 = vld [vmem:[%s7 + $0x28] sm:$0xff]
    %v231 = vld [vmem:[%s7 + $0x30] sm:$0xff]
    %v232 = vld [vmem:[%s7 + $0x38] sm:$0xff]
    %v233 = vld [vmem:[%s7 + $0x40] sm:$0xff]
    %v234 = vld [vmem:[%s7 + $0x48] sm:$0xff]
    %v235 = vld [vmem:[%s7 + $0x50] sm:$0xff]
    %v236 = vld [vmem:[%s7 + $0x58] sm:$0xff]
    %v237 = vld [vmem:[%s7 + $0x60] sm:$0xff]
    %v238 = vld [vmem:[%s7 + $0x68] sm:$0xff]
    %v239 = vld [vmem:[%s7 + $0x70] sm:$0xff]
    %v240 = vld [vmem:[%s7 + $0x78] sm:$0xff]
    %241 = vmatpush.msra.mxu0 %v240
    %242 = vmatpush.msra.mxu0 %v239
    %243 = vmatpush.msra.mxu0 %v238
    %244 = vmatpush.msra.mxu0 %v237
    %245 = vmatpush.msra.mxu0 %v236
    %246 = vmatpush.msra.mxu0 %v235
    %247 = vmatpush.msra.mxu0 %v234
    %248 = vmatpush.msra.mxu0 %v233
    %249 = vmatpush.msra.mxu0 %v232
    %250 = vmatpush.msra.mxu0 %v231
    %251 = vmatpush.msra.mxu0 %v230
    %252 = vmatpush.msra.mxu0 %v229
    %253 = vmatpush.msra.mxu0 %v228
    %254 = vmatpush.msra.mxu0 %v227
    %255 = vmatpush.msra.mxu0 %v226
    %256 = vmatpush.msra.mxu0 %v225
    %257 = vmatmul.f32.gmra.mxu0 %v224
    %v258 = vpop.f32.mrf.mxu0
    %v259 = vadd.f32 0.0, %v258
    %260 = vdwg.mxu0
    %v261 = vld [vmem:[%s1] sm:$0xff]
    %v262 = vld [vmem:[%s1 + $0x8] sm:$0xff]
    %v263 = vld [vmem:[%s1 + $0x10] sm:$0xff]
    %v264 = vld [vmem:[%s1 + $0x18] sm:$0xff]
    %v265 = vld [vmem:[%s1 + $0x20] sm:$0xff]
    %v266 = vld [vmem:[%s1 + $0x28] sm:$0xff]
    %v267 = vld [vmem:[%s1 + $0x30] sm:$0xff]
    %v268 = vld [vmem:[%s1 + $0x38] sm:$0xff]
    %v270 = vrot.slane %v259, 1
    %v271 = vrot.slane %v259, 2
    %v272 = vrot.slane %v259, 3
    %v273 = vrot.slane %v259, 4
    %v274 = vrot.slane %v259, 5
    %v275 = vrot.slane %v259, 6
    %v276 = vrot.slane %v259, 7
    %v277 = vperm.slane %v259, 0
    %v278 = vperm.slane %v270, 0
    %v279 = vperm.slane %v271, 0
    %v280 = vperm.slane %v272, 0
    %v281 = vperm.slane %v273, 0
    %v282 = vperm.slane %v274, 0
    %v283 = vperm.slane %v275, 0
    %v284 = vperm.slane %v276, 0
    %v293 = vmul.f32 %v261, %v277
    %v294 = vmul.f32 %v262, %v278
    %v295 = vmul.f32 %v263, %v279
    %v296 = vmul.f32 %v264, %v280
    %v297 = vmul.f32 %v265, %v281
    %v298 = vmul.f32 %v266, %v282
    %v299 = vmul.f32 %v267, %v283
    %v300 = vmul.f32 %v268, %v284
    %v301 = vsel %vm68, %v293, 0.0
    %302 = vadd.xlane.f32.xlu0 %v301
    %v303 = vpop.xlane.xlu0 %302
    %v304 = vsel %vm68, %v294, 0.0
    %305 = vadd.xlane.f32.xlu0 %v304
    %v306 = vpop.xlane.xlu0 %305
    %v307 = vsel %vm68, %v295, 0.0
    %308 = vadd.xlane.f32.xlu0 %v307
    %v309 = vpop.xlane.xlu0 %308
    %v310 = vsel %vm68, %v296, 0.0
    %311 = vadd.xlane.f32.xlu0 %v310
    %v312 = vpop.xlane.xlu0 %311
    %v313 = vsel %vm68, %v297, 0.0
    %314 = vadd.xlane.f32.xlu0 %v313
    %v315 = vpop.xlane.xlu0 %314
    %v316 = vsel %vm68, %v298, 0.0
    %317 = vadd.xlane.f32.xlu0 %v316
    %v318 = vpop.xlane.xlu0 %317
    %v319 = vsel %vm68, %v299, 0.0
    %320 = vadd.xlane.f32.xlu0 %v319
    %v321 = vpop.xlane.xlu0 %320
    %v322 = vsel %vm68, %v300, 0.0
    %323 = vadd.xlane.f32.xlu0 %v322
    %v324 = vpop.xlane.xlu0 %323
    %v333 = vlaneseq
    %v334 = vand.u32 %v333, 127
    %v335 = vperm.slane %v303, %v334
    %v336 = vperm.slane %v306, %v334
    %v337 = vperm.slane %v309, %v334
    %v338 = vperm.slane %v312, %v334
    %v339 = vperm.slane %v315, %v334
    %v340 = vperm.slane %v318, %v334
    %v341 = vperm.slane %v321, %v334
    %v342 = vperm.slane %v324, %v334
    %v343 = vsel %vm156, %v336, %v335
    %v344 = vsel %vm158, %v337, %v343
    %v345 = vsel %vm160, %v338, %v344
    %v346 = vsel %vm162, %v339, %v345
    %v347 = vsel %vm164, %v340, %v346
    %v348 = vsel %vm166, %v341, %v347
    %v349 = vsel %vm168, %v342, %v348
    %vm351 = vcmask 64512
    %v352 = vsel %vm351, %v349, -inf
    %353 = vmax.xlane.f32.xlu0 %v352
    %v354 = vpop.xlane.xlu0 %353
    %v356 = vperm.slane %v354, 0
    %v357 = vperm.slane %v354, 1
    %v358 = vperm.slane %v354, 2
    %v359 = vperm.slane %v354, 3
    %v360 = vperm.slane %v354, 4
    %v361 = vperm.slane %v354, 5
    %v362 = vperm.slane %v354, 6
    %v363 = vperm.slane %v354, 7
    %v372 = vsub.f32 %v303, %v356
    %v373 = vsub.f32 %v306, %v357
    %v374 = vsub.f32 %v309, %v358
    %v375 = vsub.f32 %v312, %v359
    %v376 = vsub.f32 %v315, %v360
    %v377 = vsub.f32 %v318, %v361
    %v378 = vsub.f32 %v321, %v362
    %v379 = vsub.f32 %v324, %v363
    %v380 = vmul.f32 %v372, 1.442695
    %v381 = vpow.pop %v380
    %v382 = vmul.f32 %v373, 1.442695
    %v383 = vpow.pop %v382
    %v384 = vmul.f32 %v374, 1.442695
    %v385 = vpow.pop %v384
    %v386 = vmul.f32 %v375, 1.442695
    %v387 = vpow.pop %v386
    %v388 = vmul.f32 %v376, 1.442695
    %v389 = vpow.pop %v388
    %v390 = vmul.f32 %v377, 1.442695
    %v391 = vpow.pop %v390
    %v392 = vmul.f32 %v378, 1.442695
    %v393 = vpow.pop %v392
    %v394 = vmul.f32 %v379, 1.442695
    %v395 = vpow.pop %v394
    %v396 = vld [vmem:[#allocation2] sm:$0xff]
    %v398 = vperm.slane %v396, 0
    %v399 = vlaneseq
    %v400 = vshrl.u32 %v399, 7
    %402 = vset.pattern.permute.xlu0 %v400
    %403 = vperm.xlu0 %402, %v398
    %v404 = vpop.permute.xlu0 %403
    %v405 = vperm.slane %v396, 1
    %v406 = vlaneseq
    %v407 = vshrl.u32 %v406, 7
    %409 = vset.pattern.permute.xlu0 %v407
    %410 = vperm.xlu0 %409, %v405
    %v411 = vpop.permute.xlu0 %410
    %v412 = vperm.slane %v396, 2
    %v413 = vlaneseq
    %v414 = vshrl.u32 %v413, 7
    %416 = vset.pattern.permute.xlu0 %v414
    %417 = vperm.xlu0 %416, %v412
    %v418 = vpop.permute.xlu0 %417
    %v419 = vperm.slane %v396, 3
    %v420 = vlaneseq
    %v421 = vshrl.u32 %v420, 7
    %423 = vset.pattern.permute.xlu0 %v421
    %424 = vperm.xlu0 %423, %v419
    %v425 = vpop.permute.xlu0 %424
    %v426 = vperm.slane %v396, 4
    %v427 = vlaneseq
    %v428 = vshrl.u32 %v427, 7
    %430 = vset.pattern.permute.xlu0 %v428
    %431 = vperm.xlu0 %430, %v426
    %v432 = vpop.permute.xlu0 %431
    %v433 = vperm.slane %v396, 5
    %v434 = vlaneseq
    %v435 = vshrl.u32 %v434, 7
    %437 = vset.pattern.permute.xlu0 %v435
    %438 = vperm.xlu0 %437, %v433
    %v439 = vpop.permute.xlu0 %438
    %v440 = vperm.slane %v396, 6
    %v441 = vlaneseq
    %v442 = vshrl.u32 %v441, 7
    %444 = vset.pattern.permute.xlu0 %v442
    %445 = vperm.xlu0 %444, %v440
    %v446 = vpop.permute.xlu0 %445
    %v447 = vperm.slane %v396, 7
    %v448 = vlaneseq
    %v449 = vshrl.u32 %v448, 7
    %451 = vset.pattern.permute.xlu0 %v449
    %452 = vperm.xlu0 %451, %v447
    %v453 = vpop.permute.xlu0 %452
    %v462 = vmul.f32 %v381, %v404
    %v463 = vmul.f32 %v383, %v411
    %v464 = vmul.f32 %v385, %v418
    %v465 = vmul.f32 %v387, %v425
    %v466 = vmul.f32 %v389, %v432
    %v467 = vmul.f32 %v391, %v439
    %v468 = vmul.f32 %v393, %v446
    %v469 = vmul.f32 %v395, %v453
    %478 = vset.pattern.permute.xlu0 0
    %479 = vperm.xlu0 %478, %v462
    %v480 = vpop.permute.xlu0 %479
    %481 = vset.pattern.permute.xlu0 0
    %482 = vperm.xlu0 %481, %v463
    %v483 = vpop.permute.xlu0 %482
    %484 = vset.pattern.permute.xlu0 0
    %485 = vperm.xlu0 %484, %v464
    %v486 = vpop.permute.xlu0 %485
    %487 = vset.pattern.permute.xlu0 0
    %488 = vperm.xlu0 %487, %v465
    %v489 = vpop.permute.xlu0 %488
    %490 = vset.pattern.permute.xlu0 0
    %491 = vperm.xlu0 %490, %v466
    %v492 = vpop.permute.xlu0 %491
    %493 = vset.pattern.permute.xlu0 0
    %494 = vperm.xlu0 %493, %v467
    %v495 = vpop.permute.xlu0 %494
    %496 = vset.pattern.permute.xlu0 0
    %497 = vperm.xlu0 %496, %v468
    %v498 = vpop.permute.xlu0 %497
    %499 = vset.pattern.permute.xlu0 0
    %500 = vperm.xlu0 %499, %v469
    %v501 = vpop.permute.xlu0 %500
    %v502 = vperm.slane %v480, %v334
    %v503 = vperm.slane %v483, %v334
    %v504 = vperm.slane %v486, %v334
    %v505 = vperm.slane %v489, %v334
    %v506 = vperm.slane %v492, %v334
    %v507 = vperm.slane %v495, %v334
    %v508 = vperm.slane %v498, %v334
    %v509 = vperm.slane %v501, %v334
    %v510 = vsel %vm156, %v503, %v502
    %v511 = vsel %vm158, %v504, %v510
    %v512 = vsel %vm160, %v505, %v511
    %v513 = vsel %vm162, %v506, %v512
    %v514 = vsel %vm164, %v507, %v513
    %v515 = vsel %vm166, %v508, %v514
    %v516 = vsel %vm168, %v509, %v515
    %v518 = vsel %vm351, %v516, 0.0
    %519 = vadd.xlane.f32.xlu0 %v518
    %v520 = vpop.xlane.xlu0 %519
    %vm521 = vcmp.lt.f32.partialorder %v520, 1e-07
    %v522 = vadd.f32 %v520, 1.0
    %v523 = vsel %vm521, %v522, %v520
    %v524 = vrcp.pop %v523
    %v526 = vperm.slane %v524, 0
    %v527 = vperm.slane %v524, 1
    %v528 = vperm.slane %v524, 2
    %v529 = vperm.slane %v524, 3
    %v530 = vperm.slane %v524, 4
    %v531 = vperm.slane %v524, 5
    %v532 = vperm.slane %v524, 6
    %v533 = vperm.slane %v524, 7
    %v542 = vmul.f32 %v462, %v526
    %v543 = vmul.f32 %v463, %v527
    %v544 = vmul.f32 %v464, %v528
    %v545 = vmul.f32 %v465, %v529
    %v546 = vmul.f32 %v466, %v530
    %v547 = vmul.f32 %v467, %v531
    %v548 = vmul.f32 %v468, %v532
    %v549 = vmul.f32 %v469, %v533
    %551 = vset.pattern.permute.xlu0 0
    %552 = vperm.xlu0 %551, %v542
    %v553 = vpop.permute.xlu0 %552
    %556 = vset.pattern.permute.xlu0 0
    %557 = vperm.xlu0 %556, %v543
    %v558 = vpop.permute.xlu0 %557
    %561 = vset.pattern.permute.xlu0 0
    %562 = vperm.xlu0 %561, %v544
    %v563 = vpop.permute.xlu0 %562
    %566 = vset.pattern.permute.xlu0 0
    %567 = vperm.xlu0 %566, %v545
    %v568 = vpop.permute.xlu0 %567
    %571 = vset.pattern.permute.xlu0 0
    %572 = vperm.xlu0 %571, %v546
    %v573 = vpop.permute.xlu0 %572
    %576 = vset.pattern.permute.xlu0 0
    %577 = vperm.xlu0 %576, %v547
    %v578 = vpop.permute.xlu0 %577
    %581 = vset.pattern.permute.xlu0 0
    %582 = vperm.xlu0 %581, %v548
    %v583 = vpop.permute.xlu0 %582
    %586 = vset.pattern.permute.xlu0 0
    %587 = vperm.xlu0 %586, %v549
    %v588 = vpop.permute.xlu0 %587
    %v590 = vmul.f32 %v553, %v261
    %v591 = vmul.f32 %v558, %v262
    %v592 = vmul.f32 %v563, %v263
    %v593 = vmul.f32 %v568, %v264
    %v594 = vmul.f32 %v573, %v265
    %v595 = vmul.f32 %v578, %v266
    %v596 = vmul.f32 %v583, %v267
    %v597 = vmul.f32 %v588, %v268
    %v598 = vsel %vm68, %v590, 0.0
    %v599 = vrot.slane %v598, 4
    %v600 = vadd.f32 %v598, %v599
    %v601 = vrot.slane %v600, 2
    %v602 = vadd.f32 %v600, %v601
    %v603 = vrot.slane %v602, 1
    %v604 = vadd.f32 %v602, %v603
    %v605 = vsel %vm68, %v591, 0.0
    %v606 = vrot.slane %v605, 4
    %v607 = vadd.f32 %v605, %v606
    %v608 = vrot.slane %v607, 2
    %v609 = vadd.f32 %v607, %v608
    %v610 = vrot.slane %v609, 1
    %v611 = vadd.f32 %v609, %v610
    %v612 = vsel %vm68, %v592, 0.0
    %v613 = vrot.slane %v612, 4
    %v614 = vadd.f32 %v612, %v613
    %v615 = vrot.slane %v614, 2
    %v616 = vadd.f32 %v614, %v615
    %v617 = vrot.slane %v616, 1
    %v618 = vadd.f32 %v616, %v617
    %v619 = vsel %vm68, %v593, 0.0
    %v620 = vrot.slane %v619, 4
    %v621 = vadd.f32 %v619, %v620
    %v622 = vrot.slane %v621, 2
    %v623 = vadd.f32 %v621, %v622
    %v624 = vrot.slane %v623, 1
    %v625 = vadd.f32 %v623, %v624
    %v626 = vsel %vm68, %v594, 0.0
    %v627 = vrot.slane %v626, 4
    %v628 = vadd.f32 %v626, %v627
    %v629 = vrot.slane %v628, 2
    %v630 = vadd.f32 %v628, %v629
    %v631 = vrot.slane %v630, 1
    %v632 = vadd.f32 %v630, %v631
    %v633 = vsel %vm68, %v595, 0.0
    %v634 = vrot.slane %v633, 4
    %v635 = vadd.f32 %v633, %v634
    %v636 = vrot.slane %v635, 2
    %v637 = vadd.f32 %v635, %v636
    %v638 = vrot.slane %v637, 1
    %v639 = vadd.f32 %v637, %v638
    %v640 = vsel %vm68, %v596, 0.0
    %v641 = vrot.slane %v640, 4
    %v642 = vadd.f32 %v640, %v641
    %v643 = vrot.slane %v642, 2
    %v644 = vadd.f32 %v642, %v643
    %v645 = vrot.slane %v644, 1
    %v646 = vadd.f32 %v644, %v645
    %v647 = vsel %vm68, %v597, 0.0
    %v648 = vrot.slane %v647, 4
    %v649 = vadd.f32 %v647, %v648
    %v650 = vrot.slane %v649, 2
    %v651 = vadd.f32 %v649, %v650
    %v652 = vrot.slane %v651, 1
    %v653 = vadd.f32 %v651, %v652
    %v662 = vsel %vm156, %v611, %v604
    %v663 = vsel %vm158, %v618, %v662
    %v664 = vsel %vm160, %v625, %v663
    %v665 = vsel %vm162, %v632, %v664
    %v666 = vsel %vm164, %v639, %v665
    %v667 = vsel %vm166, %v646, %v666
    %v668 = vsel %vm168, %v653, %v667
    %v670 = vadd.f32 %v192, %v668
    %v671 = vmul.f32 %v670, 0.5
    %672 = vst.msk [vmem:[#allocation7] sm:$0xff] %vm68, %v671
    // Predicated region
    $region42: #{tpu_custom_call.1} parent=1 // pred_check
      _
    $region43: #{tpu_custom_call.1} parent=1 // pred_check_branch
      %674 = sbr.rel (0) target = $region45
    $region44: #{tpu_custom_call.1} parent=1 // pred_region
      %676 = vsyncadd [#allocation4], 0
      %s678 = sshll.u32 [#allocation7], 4
      %s679 = int_to_ptr.vmem [resolvable:$true] %s678
      %s680 = sshll.u32 %s8, 4
      %s681 = int_to_ptr.hbm [resolvable:$true] %s680
      %683 = dma.vmem_to_hbm [thread:$0]  %s679, 128, %s681, [#allocation4]
    $region45: #{tpu_custom_call.1} parent=1 // pred_fallthru
      _
    // Predicated region
    $region46: #{tpu_custom_call.1} parent=1 // pred_check
      _
    $region47: #{tpu_custom_call.1} parent=1 // pred_check_branch
      %685 = sbr.rel (0) target = $region49
    $region48: #{tpu_custom_call.1} parent=1 // pred_region
      %687 = dma.done [#allocation4], 128
    $region49: #{tpu_custom_call.1} parent=1 // pred_fallthru
      _
    %688 = vsyncpa [#allocation3], 1
    %689 = vsyncpa [#allocation6], 1
    %690 = vsyncpa [#allocation4], 1

</llo_original>
